<compile_context>
chip_gen: v7x
topology: tpu7x:2x2x1
jax: 0.10.0
libtpu: 0.0.40
codegen_flags: <defaults>
</compile_context>

<pallas_src>
import jax
import jax.numpy as jnp
from jax.experimental import pallas as pl
from jax.experimental.pallas import tpu as pltpu


def _generator_kernel(z_ref, w1_ref, b1_ref, w2_ref, b2_ref, w3_ref, b3_ref,
                      out_ref):
    # fc1 + leaky_relu(0.2)   (bf16 operands, f32 accumulation)
    y = jnp.dot(z_ref[...], w1_ref[...],
                preferred_element_type=jnp.float32) + b1_ref[...]
    y = jnp.maximum(y, 0.2 * y)
    # fc2 + leaky_relu(0.2)
    y = jnp.dot(y.astype(jnp.bfloat16), w2_ref[...],
                preferred_element_type=jnp.float32) + b2_ref[...]
    y = jnp.maximum(y, 0.2 * y)
    # fc3 + tanh (tanh on the f32 accumulator -> |out| <= 1)
    y = jnp.dot(y.astype(jnp.bfloat16), w3_ref[...],
                preferred_element_type=jnp.float32) + b3_ref[...]
    out_ref[...] = jnp.tanh(y).astype(out_ref.dtype)


def _round_up(x, m):
    return ((x + m - 1) // m) * m


def generator_forward(z, params, n_channels, n_rows, n_cols, *, block_m=256):
    """z: (B, z_dim) float32 -> (B, n_channels, n_rows, n_cols) float32."""
    w1, b1, w2, b2, w3, b3 = params
    B, z_dim = z.shape
    out_feats = w3.shape[1]
    assert out_feats == n_channels * n_rows * n_cols

    # Batch tile: multiple of 8 (sublane granularity), capped at block_m.
    tm = min(block_m, _round_up(B, 8))
    b_pad = _round_up(B, tm)
    if b_pad != B:
        z = jnp.pad(z, ((0, b_pad - B), (0, 0)))

    # bf16 MXU operands (halves weight/activation DMA bytes); biases stay f32.
    z_bf = z.astype(jnp.bfloat16)
    w1_bf = w1.astype(jnp.bfloat16)
    w2_bf = w2.astype(jnp.bfloat16)
    w3_bf = w3.astype(jnp.bfloat16)

    # Weights/biases: constant index_map -> resident in VMEM across the grid.
    def resident(arr):
        return pl.BlockSpec(arr.shape, lambda i: (0, 0))

    flat = pl.pallas_call(
        _generator_kernel,
        out_shape=jax.ShapeDtypeStruct((b_pad, out_feats), jnp.float32),
        grid=(b_pad // tm,),
        in_specs=[
            pl.BlockSpec((tm, z_dim), lambda i: (i, 0)),
            resident(w1_bf), resident(b1),
            resident(w2_bf), resident(b2),
            resident(w3_bf), resident(b3),
        ],
        out_specs=pl.BlockSpec((tm, out_feats), lambda i: (i, 0)),
        compiler_params=pltpu.CompilerParams(
            dimension_semantics=("parallel",)),
    )(z_bf, w1_bf, b1, w2_bf, b2, w3_bf, b3)

    if b_pad != B:
        flat = flat[:B]
    # Same semantics as torch's y.view(-1, C, H, W)
    return flat.reshape(-1, n_channels, n_rows, n_cols)


def init_params(key, z_dim, h_dim_1, h_dim_2, n_pixels_channels):
    """Deterministic synthetic init. Weights stored as (in, out)."""
    k1, k2, k3, k4, k5, k6 = jax.random.split(key, 6)

    def lin(kw, kb, fan_in, fan_out):
        bound = 1.0 / jnp.sqrt(fan_in)
        w = jax.random.uniform(kw, (fan_in, fan_out), jnp.float32,
                               minval=-bound, maxval=bound)
        b = jax.random.uniform(kb, (1, fan_out), jnp.float32,
                               minval=-bound, maxval=bound)
        return w, b

    w1, b1 = lin(k1, k2, z_dim, h_dim_1)
    w2, b2 = lin(k3, k4, h_dim_1, h_dim_2)
    w3, b3 = lin(k5, k6, h_dim_2, n_pixels_channels)
    return (w1, b1, w2, b2, w3, b3)


def _reference(z, params):
    """Pure-JAX f32 reference of the PyTorch forward (pre-reshape)."""
    w1, b1, w2, b2, w3, b3 = params
    y = z @ w1 + b1
    y = jnp.where(y > 0, y, 0.2 * y)
    y = y @ w2 + b2
    y = jnp.where(y > 0, y, 0.2 * y)
    return jnp.tanh(y @ w3 + b3)


if __name__ == "__main__":
    # Small, module-consistent shapes.
    batch = 8
    z_dim = 32
    h_dim_1 = 64
    h_dim_2 = 128
    n_rows, n_cols, n_channels = 8, 8, 2          # n_pixels * C = 128

    key = jax.random.PRNGKey(0)
    k_z, k_p = jax.random.split(key)
    z = jax.random.normal(k_z, (batch, z_dim), jnp.float32)
    params = init_params(k_p, z_dim, h_dim_1, h_dim_2,
                         n_rows * n_cols * n_channels)

    out = generator_forward(z, params, n_channels, n_rows, n_cols)
    out = jax.block_until_ready(out)

    assert out.shape == (batch, n_channels, n_rows, n_cols), out.shape
    assert out.dtype == jnp.float32
    assert bool(jnp.all(jnp.isfinite(out)))
    assert bool(jnp.all(jnp.abs(out) <= 1.0))     # tanh range (f32 tanh)

    # bf16 matmul operands vs f32 reference: loose tolerance.
    ref = _reference(z, params).reshape(-1, n_channels, n_rows, n_cols)
    assert bool(jnp.max(jnp.abs(out - ref)) < 3e-2), float(
        jnp.max(jnp.abs(out - ref)))

    print("KERNEL_OK")
</pallas_src>

<mosaic_0001>
module attributes {stable_mosaic.version = 11 : i64} {
  func.func @_generator_kernel(%arg0: i32, %arg1: memref<8x32xbf16, #tpu.memory_space<vmem>>, %arg2: memref<32x64xbf16, #tpu.memory_space<vmem>>, %arg3: memref<1x64xf32, #tpu.memory_space<vmem>>, %arg4: memref<64x128xbf16, #tpu.memory_space<vmem>>, %arg5: memref<1x128xf32, #tpu.memory_space<vmem>>, %arg6: memref<128x128xbf16, #tpu.memory_space<vmem>>, %arg7: memref<1x128xf32, #tpu.memory_space<vmem>>, %arg8: memref<8x128xf32, #tpu.memory_space<vmem>>) attributes {dimension_semantics = [#tpu.dimension_semantics<parallel>], iteration_bounds = array<i64: 1>, scalar_prefetch = 0 : i64, scratch_operands = 0 : i64, tpu.core_type = #tpu.core_type<tc>, window_params = [{transform_indices = @transform_0, window_bounds = array<i64: 8, 32>}, {pipeline_mode = #tpu.pipeline_mode<synchronous>, transform_indices = @transform_1, window_bounds = array<i64: 32, 64>}, {pipeline_mode = #tpu.pipeline_mode<synchronous>, transform_indices = @transform_2, window_bounds = array<i64: 1, 64>}, {pipeline_mode = #tpu.pipeline_mode<synchronous>, transform_indices = @transform_3, window_bounds = array<i64: 64, 128>}, {pipeline_mode = #tpu.pipeline_mode<synchronous>, transform_indices = @transform_4, window_bounds = array<i64: 1, 128>}, {pipeline_mode = #tpu.pipeline_mode<synchronous>, transform_indices = @transform_5, window_bounds = array<i64: 128, 128>}, {pipeline_mode = #tpu.pipeline_mode<synchronous>, transform_indices = @transform_6, window_bounds = array<i64: 1, 128>}, {transform_indices = @transform_7, window_bounds = array<i64: 8, 128>}]} {
    %c0 = arith.constant 0 : index
    %c0_0 = arith.constant 0 : index
    %0 = vector.load %arg1[%c0, %c0_0] : memref<8x32xbf16, #tpu.memory_space<vmem>>, vector<8x32xbf16>
    %c0_1 = arith.constant 0 : index
    %c0_2 = arith.constant 0 : index
    %1 = vector.load %arg2[%c0_1, %c0_2] : memref<32x64xbf16, #tpu.memory_space<vmem>>, vector<32x64xbf16>
    %cst = arith.constant dense<0.000000e+00> : vector<8x64xf32>
    %2 = tpu.matmul %0, %1, %cst {dimension_numbers = #tpu.dot_dimension_numbers<[1], [0], [0], [1], [0, 0, 1, 1], [], []>} : vector<8x32xbf16>, vector<32x64xbf16>, vector<8x64xf32> -> vector<8x64xf32>
    %c0_3 = arith.constant 0 : index
    %c0_4 = arith.constant 0 : index
    %3 = vector.load %arg3[%c0_3, %c0_4] : memref<1x64xf32, #tpu.memory_space<vmem>>, vector<1x64xf32>
    %4 = vector.broadcast %3 : vector<1x64xf32> to vector<8x64xf32>
    %5 = arith.addf %2, %4 : vector<8x64xf32>
    %cst_5 = arith.constant 2.000000e-01 : f32
    %6 = vector.broadcast %cst_5 : f32 to vector<8x64xf32>
    %7 = arith.mulf %6, %5 : vector<8x64xf32>
    %8 = arith.maximumf %5, %7 : vector<8x64xf32>
    %9 = arith.truncf %8 : vector<8x64xf32> to vector<8x64xbf16>
    %c0_6 = arith.constant 0 : index
    %c0_7 = arith.constant 0 : index
    %10 = vector.load %arg4[%c0_6, %c0_7] : memref<64x128xbf16, #tpu.memory_space<vmem>>, vector<64x128xbf16>
    %cst_8 = arith.constant dense<0.000000e+00> : vector<8x128xf32>
    %11 = tpu.matmul %9, %10, %cst_8 {dimension_numbers = #tpu.dot_dimension_numbers<[1], [0], [0], [1], [0, 0, 1, 1], [], []>} : vector<8x64xbf16>, vector<64x128xbf16>, vector<8x128xf32> -> vector<8x128xf32>
    %c0_9 = arith.constant 0 : index
    %c0_10 = arith.constant 0 : index
    %12 = vector.load %arg5[%c0_9, %c0_10] : memref<1x128xf32, #tpu.memory_space<vmem>>, vector<1x128xf32>
    %13 = vector.broadcast %12 : vector<1x128xf32> to vector<8x128xf32>
    %14 = arith.addf %11, %13 : vector<8x128xf32>
    %cst_11 = arith.constant 2.000000e-01 : f32
    %15 = vector.broadcast %cst_11 : f32 to vector<8x128xf32>
    %16 = arith.mulf %15, %14 : vector<8x128xf32>
    %17 = arith.maximumf %14, %16 : vector<8x128xf32>
    %18 = arith.truncf %17 : vector<8x128xf32> to vector<8x128xbf16>
    %c0_12 = arith.constant 0 : index
    %c0_13 = arith.constant 0 : index
    %19 = vector.load %arg6[%c0_12, %c0_13] : memref<128x128xbf16, #tpu.memory_space<vmem>>, vector<128x128xbf16>
    %cst_14 = arith.constant dense<0.000000e+00> : vector<8x128xf32>
    %20 = tpu.matmul %18, %19, %cst_14 {dimension_numbers = #tpu.dot_dimension_numbers<[1], [0], [0], [1], [0, 0, 1, 1], [], []>} : vector<8x128xbf16>, vector<128x128xbf16>, vector<8x128xf32> -> vector<8x128xf32>
    %c0_15 = arith.constant 0 : index
    %c0_16 = arith.constant 0 : index
    %21 = vector.load %arg7[%c0_15, %c0_16] : memref<1x128xf32, #tpu.memory_space<vmem>>, vector<1x128xf32>
    %22 = vector.broadcast %21 : vector<1x128xf32> to vector<8x128xf32>
    %23 = arith.addf %20, %22 : vector<8x128xf32>
    %24 = math.tanh %23 : vector<8x128xf32>
    %c0_17 = arith.constant 0 : index
    %c0_18 = arith.constant 0 : index
    %25 = vector.load %arg8[%c0_17, %c0_18] : memref<8x128xf32, #tpu.memory_space<vmem>>, vector<8x128xf32>
    tpu.vector_store %arg8[%c0_17, %c0_18], %24 {strides = array<i32>} : memref<8x128xf32, #tpu.memory_space<vmem>>, vector<8x128xf32>,
    return
  }
  func.func @transform_0(%arg0: i32) -> (i32, i32) {
    %c0_i32 = arith.constant 0 : i32
    %c0_i32_0 = arith.constant 0 : i32
    return %arg0, %c0_i32 : i32, i32
  }
  func.func @transform_1(%arg0: i32) -> (i32, i32) {
    %c0_i32 = arith.constant 0 : i32
    %c0_i32_0 = arith.constant 0 : i32
    %c0_i32_1 = arith.constant 0 : i32
    return %c0_i32, %c0_i32_0 : i32, i32
  }
  func.func @transform_2(%arg0: i32) -> (i32, i32) {
    %c0_i32 = arith.constant 0 : i32
    %c0_i32_0 = arith.constant 0 : i32
    %c0_i32_1 = arith.constant 0 : i32
    return %c0_i32, %c0_i32_0 : i32, i32
  }
  func.func @transform_3(%arg0: i32) -> (i32, i32) {
    %c0_i32 = arith.constant 0 : i32
    %c0_i32_0 = arith.constant 0 : i32
    %c0_i32_1 = arith.constant 0 : i32
    return %c0_i32, %c0_i32_0 : i32, i32
  }
  func.func @transform_4(%arg0: i32) -> (i32, i32) {
    %c0_i32 = arith.constant 0 : i32
    %c0_i32_0 = arith.constant 0 : i32
    %c0_i32_1 = arith.constant 0 : i32
    return %c0_i32, %c0_i32_0 : i32, i32
  }
  func.func @transform_5(%arg0: i32) -> (i32, i32) {
    %c0_i32 = arith.constant 0 : i32
    %c0_i32_0 = arith.constant 0 : i32
    %c0_i32_1 = arith.constant 0 : i32
    return %c0_i32, %c0_i32_0 : i32, i32
  }
  func.func @transform_6(%arg0: i32) -> (i32, i32) {
    %c0_i32 = arith.constant 0 : i32
    %c0_i32_0 = arith.constant 0 : i32
    %c0_i32_1 = arith.constant 0 : i32
    return %c0_i32, %c0_i32_0 : i32, i32
  }
  func.func @transform_7(%arg0: i32) -> (i32, i32) {
    %c0_i32 = arith.constant 0 : i32
    %c0_i32_0 = arith.constant 0 : i32
    return %arg0, %c0_i32 : i32, i32
  }
}

</mosaic_0001>

<llo_original>
// kernel: tpu_custom_call.1
$region0: #{tpu_custom_call.1}
  #allocation0 [shape = 'u32[]', space=smem, size = 0x4, offset = 0x4, fixed_abs, tag = 'smem constant byte address 0x4 - core index']
  #allocation1 [shape = 'u32[144,128]{1,0:T(1,128)}', space=vmem, size = 0x12000, scoped, tag = 'internal scratch']
  %s0 = inlined_call_operand.hbm [shape: bf16[8,32], index: 0, kind: input, shape index: {}]
  %s1 = inlined_call_operand.hbm [shape: bf16[32,64], index: 1, kind: input, shape index: {}]
  %s2 = inlined_call_operand.vmem [shape: f32[1,64], index: 2, kind: input, shape index: {}]
  %s3 = inlined_call_operand.hbm [shape: bf16[64,128], index: 3, kind: input, shape index: {}]
  %s4 = inlined_call_operand.vmem [shape: f32[1,128], index: 4, kind: input, shape index: {}]
  %s5 = inlined_call_operand.hbm [shape: bf16[128,128], index: 5, kind: input, shape index: {}]
  %s6 = inlined_call_operand.vmem [shape: f32[1,128], index: 6, kind: input, shape index: {}]
  %s7 = inlined_call_operand.hbm [shape: f32[8,128], index: 7, kind: output, shape index: {}]
  %s8 = sld [smem:[#allocation0]]
  $region54: #{tpu_custom_call.1} parent=0
    _
  %s10 = ssub.s32 1, %s8
  %s11 = scalar_select 0, %s10, %s8
  $region1: #{tpu_custom_call.1} parent=0
    #allocation2 [shape = 'u8[2048]{0}', space=vmem, size = 0x800, scoped, tag = 'input window, operand 0, single buffered']
    #allocation3 [shape = 's32[1]{0}', space=sflag, size = 0x4, scoped, tag = 'scoped memory for tpu_custom_call.1']
    #allocation4 [shape = 's32[1]{0}', space=sflag, size = 0x4, scoped, tag = 'scoped memory for tpu_custom_call.1']
    #allocation5 [shape = 'u8[8192]{0}', space=vmem, size = 0x2000, scoped, tag = 'input window, operand 1, single buffered']
    #allocation6 [shape = 's32[1]{0}', space=sflag, size = 0x4, scoped, tag = 'scoped memory for tpu_custom_call.1']
    #allocation7 [shape = 'u8[16384]{0}', space=vmem, size = 0x4000, scoped, tag = 'input window, operand 3, single buffered']
    #allocation8 [shape = 'u8[32768]{0}', space=vmem, size = 0x8000, scoped, tag = 'input window, operand 5, single buffered']
    #allocation9 [shape = 's32[1]{0}', space=sflag, size = 0x4, scoped, tag = 'scoped memory for tpu_custom_call.1']
    #allocation10 [shape = 'u8[4096]{0}', space=vmem, size = 0x1000, scoped, tag = 'output window, operand 0, single buffered']
    %12 = vsyncpa [#allocation3], 0
    %13 = vsyncpa [#allocation6], 0
    %14 = vsyncpa [#allocation9], 0
    %15 = vsyncpa [#allocation4], 0
    // Predicated region
    $region2: #{tpu_custom_call.1} parent=1 // pred_check
      _
    $region3: #{tpu_custom_call.1} parent=1 // pred_check_branch
      %17 = sbr.rel (0) target = $region5
    $region4: #{tpu_custom_call.1} parent=1 // pred_region
      %s19 = ssub.s32 64, 64
      %20 = vsyncadd [#allocation3], %s19
      %s22 = sshll.u32 [#allocation2], 4
      %s23 = int_to_ptr.vmem [resolvable:$true] %s22
      %25 = dma.hbm_to_vmem [thread:$0]  %s0, 64, %s23, [#allocation3]
    $region5: #{tpu_custom_call.1} parent=1 // pred_fallthru
      _
    // Predicated region
    $region6: #{tpu_custom_call.1} parent=1 // pred_check
      _
    $region7: #{tpu_custom_call.1} parent=1 // pred_check_branch
      %27 = sbr.rel (0) target = $region9
    $region8: #{tpu_custom_call.1} parent=1 // pred_region
      %s29 = ssub.s32 256, 256
      %30 = vsyncadd [#allocation6], %s29
      %s31 = sshll.u32 [#allocation5], 4
      %s32 = int_to_ptr.vmem [resolvable:$true] %s31
      %37 = dma.hbm_to_vmem [thread:$0]  %s1, 256, %s32, [#allocation6], 64, 64, 4
    $region9: #{tpu_custom_call.1} parent=1 // pred_fallthru
      _
    // Predicated region
    $region10: #{tpu_custom_call.1} parent=1 // pred_check
      _
    $region11: #{tpu_custom_call.1} parent=1 // pred_check_branch
      %39 = sbr.rel (0) target = $region13
    $region12: #{tpu_custom_call.1} parent=1 // pred_region
      _
    $region13: #{tpu_custom_call.1} parent=1 // pred_fallthru
      _
    // Predicated region
    $region14: #{tpu_custom_call.1} parent=1 // pred_check
      _
    $region15: #{tpu_custom_call.1} parent=1 // pred_check_branch
      %41 = sbr.rel (0) target = $region17
    $region16: #{tpu_custom_call.1} parent=1 // pred_region
      %s43 = ssub.s32 512, 512
      %44 = vsyncadd [#allocation6], %s43
      %s45 = sshll.u32 [#allocation7], 4
      %s46 = int_to_ptr.vmem [resolvable:$true] %s45
      %51 = dma.hbm_to_vmem [thread:$0]  %s3, 512, %s46, [#allocation6], 64, 64, 4
    $region17: #{tpu_custom_call.1} parent=1 // pred_fallthru
      _
    // Predicated region
    $region18: #{tpu_custom_call.1} parent=1 // pred_check
      _
    $region19: #{tpu_custom_call.1} parent=1 // pred_check_branch
      %53 = sbr.rel (0) target = $region21
    $region20: #{tpu_custom_call.1} parent=1 // pred_region
      _
    $region21: #{tpu_custom_call.1} parent=1 // pred_fallthru
      _
    // Predicated region
    $region22: #{tpu_custom_call.1} parent=1 // pred_check
      _
    $region23: #{tpu_custom_call.1} parent=1 // pred_check_branch
      %55 = sbr.rel (0) target = $region25
    $region24: #{tpu_custom_call.1} parent=1 // pred_region
      %s57 = ssub.s32 1024, 1024
      %58 = vsyncadd [#allocation9], %s57
      %s59 = sshll.u32 [#allocation8], 4
      %s60 = int_to_ptr.vmem [resolvable:$true] %s59
      %65 = dma.hbm_to_vmem [thread:$0]  %s5, 1024, %s60, [#allocation9], 64, 64, 4
    $region25: #{tpu_custom_call.1} parent=1 // pred_fallthru
      _
    // Predicated region
    $region26: #{tpu_custom_call.1} parent=1 // pred_check
      _
    $region27: #{tpu_custom_call.1} parent=1 // pred_check_branch
      %67 = sbr.rel (0) target = $region29
    $region28: #{tpu_custom_call.1} parent=1 // pred_region
      _
    $region29: #{tpu_custom_call.1} parent=1 // pred_fallthru
      _
    // Predicated region
    $region30: #{tpu_custom_call.1} parent=1 // pred_check
      _
    $region31: #{tpu_custom_call.1} parent=1 // pred_check_branch
      %69 = sbr.rel (0) target = $region33
    $region32: #{tpu_custom_call.1} parent=1 // pred_region
      %70 = dma.done [#allocation3], 64
    $region33: #{tpu_custom_call.1} parent=1 // pred_fallthru
      _
    // Predicated region
    $region34: #{tpu_custom_call.1} parent=1 // pred_check
      _
    $region35: #{tpu_custom_call.1} parent=1 // pred_check_branch
      %72 = sbr.rel (0) target = $region37
    $region36: #{tpu_custom_call.1} parent=1 // pred_region
      %73 = dma.done [#allocation6], 256
    $region37: #{tpu_custom_call.1} parent=1 // pred_fallthru
      _
    // Predicated region
    $region38: #{tpu_custom_call.1} parent=1 // pred_check
      _
    $region39: #{tpu_custom_call.1} parent=1 // pred_check_branch
      %75 = sbr.rel (0) target = $region41
    $region40: #{tpu_custom_call.1} parent=1 // pred_region
      %76 = dma.done [#allocation6], 512
    $region41: #{tpu_custom_call.1} parent=1 // pred_fallthru
      _
    // Predicated region
    $region42: #{tpu_custom_call.1} parent=1 // pred_check
      _
    $region43: #{tpu_custom_call.1} parent=1 // pred_check_branch
      %78 = sbr.rel (0) target = $region45
    $region44: #{tpu_custom_call.1} parent=1 // pred_region
      %79 = dma.done [#allocation9], 1024
    $region45: #{tpu_custom_call.1} parent=1 // pred_fallthru
      _
    %v81 = vld [vmem:[#allocation2] sm:$0xf]
    %v82 = vld [vmem:[#allocation5] sm:$0xf]
    %v83 = vld [vmem:[#allocation5 + $0x4] sm:$0xf]
    %v84 = vld [vmem:[#allocation5 + $0x8] sm:$0xf]
    %v85 = vld [vmem:[#allocation5 + $0xc] sm:$0xf]
    %v86 = vld [vmem:[%s2] sm:$0x1]
    %v88 = vlaneseq
    %v89 = vshrl.u32 %v88, 7
    %v90 = vsub.s32 0, %v89
    %v91 = vrot.slane %v86, %v90
    %v97 = vunpack.c.l.b16 %v82
    %v98 = vunpack.c.l.b16 %v83
    %v99 = vunpack.c.l.b16 %v84
    %v100 = vunpack.c.l.b16 %v85
    %v101 = vpack.c.b16 %v98, %v97
    %v102 = vpack.c.b16 %v100, %v99
    %vm105 = vcmask 261120
    %v107 = vsel %vm105, %v81, 0
    %109 = vmatprep.subr.bf16.mxu0 0
    %110 = vmatpush1.bf16.msra.mxu0 %v101
    %111 = vmatprep.subr.bf16.mxu0 0
    %112 = vmatpush1.bf16.msra.mxu0 %v102
    %113 = vmatprep.subr.bf16.mxu0 0
    %114 = vmatpush1.bf16.msra.mxu0 0
    %115 = vmatprep.subr.bf16.mxu0 0
    %116 = vmatpush1.bf16.msra.mxu0 0
    %117 = vmatprep.subr.bf16.mxu0 0
    %118 = vmatpush1.bf16.msra.mxu0 0
    %119 = vmatprep.subr.bf16.mxu0 0
    %120 = vmatpush1.bf16.msra.mxu0 0
    %121 = vmatprep.subr.bf16.mxu0 0
    %122 = vmatpush1.bf16.msra.mxu0 0
    %123 = vmatprep.subr.bf16.mxu0 0
    %124 = vmatpush1.bf16.msra.mxu0 0
    %125 = vmatprep.subr.bf16.mxu0 0
    %126 = vmatpush1.bf16.msra.mxu0 0
    %127 = vmatprep.subr.bf16.mxu0 0
    %128 = vmatpush1.bf16.msra.mxu0 0
    %129 = vmatprep.subr.bf16.mxu0 0
    %130 = vmatpush1.bf16.msra.mxu0 0
    %131 = vmatprep.subr.bf16.mxu0 0
    %132 = vmatpush1.bf16.msra.mxu0 0
    %133 = vmatprep.subr.bf16.mxu0 0
    %134 = vmatpush1.bf16.msra.mxu0 0
    %135 = vmatprep.subr.bf16.mxu0 0
    %136 = vmatpush1.bf16.msra.mxu0 0
    %137 = vmatprep.subr.bf16.mxu0 0
    %138 = vmatpush1.bf16.msra.mxu0 0
    %139 = vmatprep.subr.bf16.mxu0 0
    %140 = vmatpush1.bf16.msra.mxu0 0
    %141 = vmatprep.mubr.bf16.mxu0 0
    %142 = vmatmul.mubr.bf16.gmra.mrb[0].mxu0 %v107
    %v143 = vpop.f32.mrb[0].mxu0
    %v144 = vadd.f32 %v91, %v143
    %v145 = vpop.f32.mrb[0].mxu0
    %v146 = vpop.f32.mrb[0].mxu0
    %v147 = vpop.f32.mrb[0].mxu0
    %148 = vdwg.mxu0
    %v149 = vmul.f32 %v144, 0.2
    %v150 = vmax.f32 %v144, %v149
    %v151 = vpack.c.bf16 %v150, %v150
    %v152 = vld [vmem:[#allocation7] sm:$0xf]
    %v153 = vld [vmem:[#allocation7 + $0x4] sm:$0xf]
    %v154 = vld [vmem:[#allocation7 + $0x8] sm:$0xf]
    %v155 = vld [vmem:[#allocation7 + $0xc] sm:$0xf]
    %v156 = vld [vmem:[#allocation7 + $0x10] sm:$0xf]
    %v157 = vld [vmem:[#allocation7 + $0x14] sm:$0xf]
    %v158 = vld [vmem:[#allocation7 + $0x18] sm:$0xf]
    %v159 = vld [vmem:[#allocation7 + $0x1c] sm:$0xf]
    %v160 = vld [vmem:[%s4] sm:$0x1]
    %v162 = vlaneseq
    %v163 = vshrl.u32 %v162, 7
    %v164 = vsub.s32 0, %v163
    %v165 = vrot.slane %v160, %v164
    %v175 = vunpack.c.l.b16 %v152
    %v176 = vunpack.c.l.b16 %v153
    %v177 = vunpack.c.l.b16 %v154
    %v178 = vunpack.c.l.b16 %v155
    %v179 = vunpack.c.l.b16 %v156
    %v180 = vunpack.c.l.b16 %v157
    %v181 = vunpack.c.l.b16 %v158
    %v182 = vunpack.c.l.b16 %v159
    %v183 = vpack.c.b16 %v176, %v175
    %v184 = vpack.c.b16 %v178, %v177
    %v185 = vpack.c.b16 %v180, %v179
    %v186 = vpack.c.b16 %v182, %v181
    %vm191 = vcmask 523264
    %v193 = vsel %vm191, %v151, 0
    %195 = vmatprep.subr.bf16.mxu0 0
    %196 = vmatpush1.bf16.msra.mxu0 %v183
    %197 = vmatprep.subr.bf16.mxu0 0
    %198 = vmatpush1.bf16.msra.mxu0 %v184
    %199 = vmatprep.subr.bf16.mxu0 0
    %200 = vmatpush1.bf16.msra.mxu0 %v185
    %201 = vmatprep.subr.bf16.mxu0 0
    %202 = vmatpush1.bf16.msra.mxu0 %v186
    %203 = vmatprep.subr.bf16.mxu0 0
    %204 = vmatpush1.bf16.msra.mxu0 0
    %205 = vmatprep.subr.bf16.mxu0 0
    %206 = vmatpush1.bf16.msra.mxu0 0
    %207 = vmatprep.subr.bf16.mxu0 0
    %208 = vmatpush1.bf16.msra.mxu0 0
    %209 = vmatprep.subr.bf16.mxu0 0
    %210 = vmatpush1.bf16.msra.mxu0 0
    %211 = vmatprep.subr.bf16.mxu0 0
    %212 = vmatpush1.bf16.msra.mxu0 0
    %213 = vmatprep.subr.bf16.mxu0 0
    %214 = vmatpush1.bf16.msra.mxu0 0
    %215 = vmatprep.subr.bf16.mxu0 0
    %216 = vmatpush1.bf16.msra.mxu0 0
    %217 = vmatprep.subr.bf16.mxu0 0
    %218 = vmatpush1.bf16.msra.mxu0 0
    %219 = vmatprep.subr.bf16.mxu0 0
    %220 = vmatpush1.bf16.msra.mxu0 0
    %221 = vmatprep.subr.bf16.mxu0 0
    %222 = vmatpush1.bf16.msra.mxu0 0
    %223 = vmatprep.subr.bf16.mxu0 0
    %224 = vmatpush1.bf16.msra.mxu0 0
    %225 = vmatprep.subr.bf16.mxu0 0
    %226 = vmatpush1.bf16.msra.mxu0 0
    %227 = vmatprep.mubr.bf16.mxu0 0
    %228 = vmatmul.mubr.bf16.gmra.mrb[0].mxu0 %v193
    %v229 = vpop.f32.mrb[0].mxu0
    %v230 = vadd.f32 %v165, %v229
    %v231 = vpop.f32.mrb[0].mxu0
    %v232 = vpop.f32.mrb[0].mxu0
    %v233 = vpop.f32.mrb[0].mxu0
    %234 = vdwg.mxu0
    %v235 = vmul.f32 %v230, 0.2
    %v236 = vmax.f32 %v230, %v235
    %v237 = vpack.c.bf16 %v236, %v236
    %v238 = vld [vmem:[#allocation8] sm:$0xf]
    %v239 = vld [vmem:[#allocation8 + $0x4] sm:$0xf]
    %v240 = vld [vmem:[#allocation8 + $0x8] sm:$0xf]
    %v241 = vld [vmem:[#allocation8 + $0xc] sm:$0xf]
    %v242 = vld [vmem:[#allocation8 + $0x10] sm:$0xf]
    %v243 = vld [vmem:[#allocation8 + $0x14] sm:$0xf]
    %v244 = vld [vmem:[#allocation8 + $0x18] sm:$0xf]
    %v245 = vld [vmem:[#allocation8 + $0x1c] sm:$0xf]
    %v246 = vld [vmem:[#allocation8 + $0x20] sm:$0xf]
    %v247 = vld [vmem:[#allocation8 + $0x24] sm:$0xf]
    %v248 = vld [vmem:[#allocation8 + $0x28] sm:$0xf]
    %v249 = vld [vmem:[#allocation8 + $0x2c] sm:$0xf]
    %v250 = vld [vmem:[#allocation8 + $0x30] sm:$0xf]
    %v251 = vld [vmem:[#allocation8 + $0x34] sm:$0xf]
    %v252 = vld [vmem:[#allocation8 + $0x38] sm:$0xf]
    %v253 = vld [vmem:[#allocation8 + $0x3c] sm:$0xf]
    %v254 = vld [vmem:[%s6] sm:$0x1]
    %v256 = vlaneseq
    %v257 = vshrl.u32 %v256, 7
    %v258 = vsub.s32 0, %v257
    %v259 = vrot.slane %v254, %v258
    %v277 = vunpack.c.l.b16 %v238
    %v278 = vunpack.c.l.b16 %v239
    %v279 = vunpack.c.l.b16 %v240
    %v280 = vunpack.c.l.b16 %v241
    %v281 = vunpack.c.l.b16 %v242
    %v282 = vunpack.c.l.b16 %v243
    %v283 = vunpack.c.l.b16 %v244
    %v284 = vunpack.c.l.b16 %v245
    %v285 = vunpack.c.l.b16 %v246
    %v286 = vunpack.c.l.b16 %v247
    %v287 = vunpack.c.l.b16 %v248
    %v288 = vunpack.c.l.b16 %v249
    %v289 = vunpack.c.l.b16 %v250
    %v290 = vunpack.c.l.b16 %v251
    %v291 = vunpack.c.l.b16 %v252
    %v292 = vunpack.c.l.b16 %v253
    %v293 = vpack.c.b16 %v278, %v277
    %v294 = vpack.c.b16 %v280, %v279
    %v295 = vpack.c.b16 %v282, %v281
    %v296 = vpack.c.b16 %v284, %v283
    %v297 = vpack.c.b16 %v286, %v285
    %v298 = vpack.c.b16 %v288, %v287
    %v299 = vpack.c.b16 %v290, %v289
    %v300 = vpack.c.b16 %v292, %v291
    %309 = vmatprep.subr.bf16.mxu0 0
    %310 = vmatpush1.bf16.msra.mxu0 %v293
    %311 = vmatprep.subr.bf16.mxu0 0
    %312 = vmatpush1.bf16.msra.mxu0 %v294
    %313 = vmatprep.subr.bf16.mxu0 0
    %314 = vmatpush1.bf16.msra.mxu0 %v295
    %315 = vmatprep.subr.bf16.mxu0 0
    %316 = vmatpush1.bf16.msra.mxu0 %v296
    %317 = vmatprep.subr.bf16.mxu0 0
    %318 = vmatpush1.bf16.msra.mxu0 %v297
    %319 = vmatprep.subr.bf16.mxu0 0
    %320 = vmatpush1.bf16.msra.mxu0 %v298
    %321 = vmatprep.subr.bf16.mxu0 0
    %322 = vmatpush1.bf16.msra.mxu0 %v299
    %323 = vmatprep.subr.bf16.mxu0 0
    %324 = vmatpush1.bf16.msra.mxu0 %v300
    %325 = vmatprep.subr.bf16.mxu0 0
    %326 = vmatpush1.bf16.msra.mxu0 0
    %327 = vmatprep.subr.bf16.mxu0 0
    %328 = vmatpush1.bf16.msra.mxu0 0
    %329 = vmatprep.subr.bf16.mxu0 0
    %330 = vmatpush1.bf16.msra.mxu0 0
    %331 = vmatprep.subr.bf16.mxu0 0
    %332 = vmatpush1.bf16.msra.mxu0 0
    %333 = vmatprep.subr.bf16.mxu0 0
    %334 = vmatpush1.bf16.msra.mxu0 0
    %335 = vmatprep.subr.bf16.mxu0 0
    %336 = vmatpush1.bf16.msra.mxu0 0
    %337 = vmatprep.subr.bf16.mxu0 0
    %338 = vmatpush1.bf16.msra.mxu0 0
    %339 = vmatprep.subr.bf16.mxu0 0
    %340 = vmatpush1.bf16.msra.mxu0 0
    %341 = vmatprep.mubr.bf16.mxu0 0
    %342 = vmatmul.mubr.bf16.gmra.mrb[0].mxu0 %v237
    %v343 = vpop.f32.mrb[0].mxu0
    %v344 = vadd.f32 %v259, %v343
    %v345 = vpop.f32.mrb[0].mxu0
    %v346 = vpop.f32.mrb[0].mxu0
    %v347 = vpop.f32.mrb[0].mxu0
    %348 = vdwg.mxu0
    %v349 = vtanh.pop %v344
    %350 = vst [vmem:[#allocation10] sm:$0xff] %v349
    // Predicated region
    $region46: #{tpu_custom_call.1} parent=1 // pred_check
      _
    $region47: #{tpu_custom_call.1} parent=1 // pred_check_branch
      %352 = sbr.rel (0) target = $region49
    $region48: #{tpu_custom_call.1} parent=1 // pred_region
      %s354 = ssub.s32 128, 128
      %355 = vsyncadd [#allocation4], %s354
      %s357 = sshll.u32 [#allocation10], 4
      %s358 = int_to_ptr.vmem [resolvable:$true] %s357
      %360 = dma.vmem_to_hbm [thread:$0]  %s358, 128, %s7, [#allocation4]
    $region49: #{tpu_custom_call.1} parent=1 // pred_fallthru
      _
    // Predicated region
    $region50: #{tpu_custom_call.1} parent=1 // pred_check
      _
    $region51: #{tpu_custom_call.1} parent=1 // pred_check_branch
      %362 = sbr.rel (0) target = $region53
    $region52: #{tpu_custom_call.1} parent=1 // pred_region
      %363 = dma.done [#allocation4], 128
    $region53: #{tpu_custom_call.1} parent=1 // pred_fallthru
      _
    %364 = vsyncpa [#allocation3], 1
    %365 = vsyncpa [#allocation6], 1
    %366 = vsyncpa [#allocation9], 1
    %367 = vsyncpa [#allocation4], 1

</llo_original>
